<compile_context>
chip_gen: v7x
topology: tpu7x:2x2x1
jax: 0.10.0
libtpu: 0.0.40
codegen_flags: <defaults>
</compile_context>

<pallas_src>
import jax
import jax.numpy as jnp
from jax.experimental import pallas as pl
from jax.experimental.pallas import tpu as pltpu


def _nconv_kernel(a_ref, x_ref, o_ref, compute_dtype):
    # a_ref: (tb, tw, V)   x_ref: (tb, V, tl)   o_ref: (tb, tw, tl)
    a = a_ref[...]
    x = x_ref[...]
    if compute_dtype is not None:
        a = a.astype(compute_dtype)
        x = x.astype(compute_dtype)
    acc = jnp.einsum('bwv,bvl->bwl', a, x, preferred_element_type=jnp.float32)
    o_ref[...] = acc.astype(o_ref.dtype)


def _pick_tile(dim, gran, cap):
    """Tile size for one axis.

    Full extent if it fits under the cap (always a legal block dim);
    otherwise the largest multiple of `gran` <= cap (cdiv grid handles the
    partial last block)."""
    if dim <= cap:
        return dim
    return max((cap // gran) * gran, gran)


def nconv(x, A, *, tw_cap=256, tl_cap=512,
          block_budget_bytes=4 * 1024 * 1024, compute_dtype=None):
    """out[n, w, l] = sum_v A[n, w, v] * x[n, v, l]  (einsum 'nvl,nwv->nwl')."""
    N, V, L = x.shape
    Na, W, Va = A.shape
    assert N == Na and V == Va, "shape mismatch between x and A"

    out_dtype = jnp.result_type(x.dtype, A.dtype)
    itemsize = max(jnp.dtype(x.dtype).itemsize, jnp.dtype(A.dtype).itemsize)
    # Sublane granularity is dtype dependent: (8,128) f32, (16,128) bf16,
    # (32,128) int8/fp8.
    sub_gran = {4: 8, 2: 16, 1: 32}.get(itemsize, 8)

    tw = _pick_tile(W, sub_gran, tw_cap)   # W tile (sublane axis of out)
    tl = _pick_tile(L, 128, tl_cap)        # L tile (lane axis of out)

    # Fold as many batches per grid step as the per-step block budget allows.
    per_batch_bytes = itemsize * (tw * V + V * tl + tw * tl)
    tb = max(1, min(N, block_budget_bytes // max(per_batch_bytes, 1)))

    nb = pl.cdiv(N, tb)
    nw = pl.cdiv(W, tw)
    nl = pl.cdiv(L, tl)

    # Grid order for operand reuse: keep the larger per-batch operand's block
    # index constant over the innermost axis so it is fetched only once.
    if V * L >= W * V:
        # x (V, L) is larger -> make wi the innermost axis; x reused, A restreamed.
        grid = (nb, nl, nw)
        a_map = lambda b, li, wi: (b, wi, 0)
        x_map = lambda b, li, wi: (b, 0, li)
        o_map = lambda b, li, wi: (b, wi, li)
    else:
        # A (W, V) is larger -> make li the innermost axis; A reused, x restreamed.
        grid = (nb, nw, nl)
        a_map = lambda b, wi, li: (b, wi, 0)
        x_map = lambda b, wi, li: (b, 0, li)
        o_map = lambda b, wi, li: (b, wi, li)

    # VMEM budget for the chosen blocks: double-buffered in/out + f32 acc + slack.
    block_bytes = tb * per_batch_bytes
    acc_bytes = tb * tw * tl * 4
    vmem_limit = int(min(64 * 1024 * 1024,
                         max(2 * block_bytes + acc_bytes + (2 << 20),
                             4 * 1024 * 1024)))

    cost = pl.CostEstimate(
        flops=2 * N * W * V * L,
        transcendentals=0,
        bytes_accessed=itemsize * (N * V * L + N * W * V)
        + jnp.dtype(out_dtype).itemsize * N * W * L,
    )

    kernel = lambda a_ref, x_ref, o_ref: _nconv_kernel(
        a_ref, x_ref, o_ref, compute_dtype)

    out = pl.pallas_call(
        kernel,
        out_shape=jax.ShapeDtypeStruct((N, W, L), out_dtype),
        grid_spec=pltpu.PrefetchScalarGridSpec(
            num_scalar_prefetch=0,
            grid=grid,
            in_specs=[
                # A tile: (tb, tw, V) — full contraction dim resident per step.
                pl.BlockSpec((tb, tw, V), a_map),
                # x tile: (tb, V, tl) — lane-dense along L.
                pl.BlockSpec((tb, V, tl), x_map),
            ],
            # out tile: (tb, tw, tl) — written once, never revisited.
            out_specs=pl.BlockSpec((tb, tw, tl), o_map),
        ),
        compiler_params=pltpu.CompilerParams(
            dimension_semantics=("parallel", "parallel", "parallel"),
            vmem_limit_bytes=vmem_limit),
        cost_estimate=cost,
    )(A, x)
    return out


if __name__ == "__main__":
    # Small shapes consistent with the module: batch=2, nodes V=W=16, seq L=32.
    N, V, W, L = 2, 16, 16, 32

    key = jax.random.PRNGKey(0)
    kx, ka = jax.random.split(key)
    x = jax.random.normal(kx, (N, V, L), dtype=jnp.float32)
    A = jax.random.normal(ka, (N, W, V), dtype=jnp.float32)

    out = jax.block_until_ready(nconv(x, A))

    # Reference: the exact einsum from the PyTorch module.
    ref = jnp.einsum('nvl,nwv->nwl', x, A)
    assert out.shape == (N, W, L)
    assert jnp.allclose(out, ref, atol=1e-4, rtol=1e-4)

    print("KERNEL_OK")
</pallas_src>

<mosaic_0001>
module attributes {stable_mosaic.version = 11 : i64} {
  func.func @_lambda_(%arg0: i32, %arg1: i32, %arg2: i32, %arg3: memref<2x16x16xf32, #tpu.memory_space<vmem>>, %arg4: memref<2x16x32xf32, #tpu.memory_space<vmem>>, %arg5: memref<2x16x32xf32, #tpu.memory_space<vmem>>) attributes {dimension_semantics = [#tpu.dimension_semantics<parallel>, #tpu.dimension_semantics<parallel>, #tpu.dimension_semantics<parallel>], iteration_bounds = array<i64: 1, 1, 1>, scalar_prefetch = 0 : i64, scratch_operands = 0 : i64, tpu.core_type = #tpu.core_type<tc>, window_params = [{transform_indices = @transform_0, window_bounds = array<i64: 2, 16, 16>}, {transform_indices = @transform_1, window_bounds = array<i64: 2, 16, 32>}, {transform_indices = @transform_2, window_bounds = array<i64: 2, 16, 32>}]} {
    %c0 = arith.constant 0 : index
    %c0_0 = arith.constant 0 : index
    %c0_1 = arith.constant 0 : index
    %0 = vector.load %arg3[%c0, %c0_0, %c0_1] : memref<2x16x16xf32, #tpu.memory_space<vmem>>, vector<2x16x16xf32>
    %c0_2 = arith.constant 0 : index
    %c0_3 = arith.constant 0 : index
    %c0_4 = arith.constant 0 : index
    %1 = vector.load %arg4[%c0_2, %c0_3, %c0_4] : memref<2x16x32xf32, #tpu.memory_space<vmem>>, vector<2x16x32xf32>
    "tpu.trace_start"() <{level = 10 : i32, message = "bwv,bvl->bwl"}> : () -> ()
    %cst = arith.constant dense<0.000000e+00> : vector<2x16x32xf32>
    %2 = tpu.matmul %0, %1, %cst {dimension_numbers = #tpu.dot_dimension_numbers<[2], [1], [1], [2], [0, 0, 0, 1, 1, 2], [0], [0]>} : vector<2x16x16xf32>, vector<2x16x32xf32>, vector<2x16x32xf32> -> vector<2x16x32xf32>
    "tpu.trace_stop"() : () -> ()
    %c0_5 = arith.constant 0 : index
    %c0_6 = arith.constant 0 : index
    %c0_7 = arith.constant 0 : index
    %3 = vector.load %arg5[%c0_5, %c0_6, %c0_7] : memref<2x16x32xf32, #tpu.memory_space<vmem>>, vector<2x16x32xf32>
    tpu.vector_store %arg5[%c0_5, %c0_6, %c0_7], %2 {strides = array<i32>} : memref<2x16x32xf32, #tpu.memory_space<vmem>>, vector<2x16x32xf32>,
    return
  }
  func.func @transform_0(%arg0: i32, %arg1: i32, %arg2: i32) -> (i32, i32, i32) {
    %c0_i32 = arith.constant 0 : i32
    %c0_i32_0 = arith.constant 0 : i32
    return %arg0, %arg2, %c0_i32 : i32, i32, i32
  }
  func.func @transform_1(%arg0: i32, %arg1: i32, %arg2: i32) -> (i32, i32, i32) {
    %c0_i32 = arith.constant 0 : i32
    %c0_i32_0 = arith.constant 0 : i32
    return %arg0, %c0_i32, %arg1 : i32, i32, i32
  }
  func.func @transform_2(%arg0: i32, %arg1: i32, %arg2: i32) -> (i32, i32, i32) {
    %c0_i32 = arith.constant 0 : i32
    return %arg0, %arg2, %arg1 : i32, i32, i32
  }
}

</mosaic_0001>

<llo_original>
// kernel: tpu_custom_call.1
$region0: #{tpu_custom_call.1}
  #allocation0 [shape = 'u32[]', space=smem, size = 0x4, offset = 0x4, fixed_abs, tag = 'smem constant byte address 0x4 - core index']
  #allocation1 [shape = 'u32[144,128]{1,0:T(1,128)}', space=vmem, size = 0x12000, scoped, tag = 'internal scratch']
  %s0 = inlined_call_operand.hbm [shape: f32[2,16,16], index: 0, kind: input, shape index: {}]
  %s1 = inlined_call_operand.hbm [shape: f32[2,16,32], index: 1, kind: input, shape index: {}]
  %s2 = inlined_call_operand.hbm [shape: f32[2,16,32], index: 2, kind: output, shape index: {}]
  %s3 = sld [smem:[#allocation0]]
  $region26: #{tpu_custom_call.1} parent=0
    _
  %s5 = ssub.s32 1, %s3
  %s6 = scalar_select 0, %s5, %s3
  $region1: #{tpu_custom_call.1} parent=0
    #allocation2 [shape = 'u8[16384]{0}', space=vmem, size = 0x4000, scoped, tag = 'input window, operand 0, single buffered']
    #allocation3 [shape = 's32[1]{0}', space=sflag, size = 0x4, scoped, tag = 'scoped memory for tpu_custom_call.1']
    #allocation4 [shape = 's32[1]{0}', space=sflag, size = 0x4, scoped, tag = 'scoped memory for tpu_custom_call.1']
    #allocation5 [shape = 'u8[16384]{0}', space=vmem, size = 0x4000, scoped, tag = 'input window, operand 1, single buffered']
    #allocation6 [shape = 's32[1]{0}', space=sflag, size = 0x4, scoped, tag = 'scoped memory for tpu_custom_call.1']
    #allocation7 [shape = 'u8[16384]{0}', space=vmem, size = 0x4000, scoped, tag = 'output window, operand 0, single buffered']
    %7 = vsyncpa [#allocation3], 0
    %8 = vsyncpa [#allocation6], 0
    %9 = vsyncpa [#allocation4], 0
    // Predicated region
    $region2: #{tpu_custom_call.1} parent=1 // pred_check
      _
    $region3: #{tpu_custom_call.1} parent=1 // pred_check_branch
      %11 = sbr.rel (0) target = $region5
    $region4: #{tpu_custom_call.1} parent=1 // pred_region
      %s13 = ssub.s32 512, 512
      %14 = vsyncadd [#allocation3], %s13
      %s15 = sshll.u32 [#allocation2], 4
      %s16 = int_to_ptr.vmem [resolvable:$true] %s15
      %21 = dma.hbm_to_vmem [thread:$0]  %s0, 512, %s16, [#allocation3], 128, 128, 8
    $region5: #{tpu_custom_call.1} parent=1 // pred_fallthru
      _
    // Predicated region
    $region6: #{tpu_custom_call.1} parent=1 // pred_check
      _
    $region7: #{tpu_custom_call.1} parent=1 // pred_check_branch
      %23 = sbr.rel (0) target = $region9
    $region8: #{tpu_custom_call.1} parent=1 // pred_region
      %s25 = ssub.s32 512, 512
      %26 = vsyncadd [#allocation6], %s25
      %s27 = sshll.u32 [#allocation5], 4
      %s28 = int_to_ptr.vmem [resolvable:$true] %s27
      %33 = dma.hbm_to_vmem [thread:$0]  %s1, 512, %s28, [#allocation6], 128, 128, 8
    $region9: #{tpu_custom_call.1} parent=1 // pred_fallthru
      _
    // Predicated region
    $region10: #{tpu_custom_call.1} parent=1 // pred_check
      _
    $region11: #{tpu_custom_call.1} parent=1 // pred_check_branch
      %35 = sbr.rel (0) target = $region13
    $region12: #{tpu_custom_call.1} parent=1 // pred_region
      %36 = dma.done [#allocation3], 512
    $region13: #{tpu_custom_call.1} parent=1 // pred_fallthru
      _
    // Predicated region
    $region14: #{tpu_custom_call.1} parent=1 // pred_check
      _
    $region15: #{tpu_custom_call.1} parent=1 // pred_check_branch
      %38 = sbr.rel (0) target = $region17
    $region16: #{tpu_custom_call.1} parent=1 // pred_region
      %39 = dma.done [#allocation6], 512
    $region17: #{tpu_custom_call.1} parent=1 // pred_fallthru
      _
    %v40 = vld [vmem:[#allocation2] sm:$0xff]
    %v41 = vld [vmem:[#allocation2 + $0x8] sm:$0xff]
    %v42 = vld [vmem:[#allocation2 + $0x10] sm:$0xff]
    %v43 = vld [vmem:[#allocation2 + $0x18] sm:$0xff]
    %v44 = vld [vmem:[#allocation5] sm:$0xff]
    %v45 = vld [vmem:[#allocation5 + $0x8] sm:$0xff]
    %v46 = vld [vmem:[#allocation5 + $0x10] sm:$0xff]
    %v47 = vld [vmem:[#allocation5 + $0x18] sm:$0xff]
    %vm48 = vcmask 130048
    %v50 = vsel %vm48, %v40, 0
    %v53 = vsel %vm48, %v41, 0
    %55 = vmatprep.subr.mxu0 0.0
    %56 = vmatpush1.msra.mxu0 %v44
    %57 = vmatprep.subr.mxu0 0.0
    %58 = vmatpush1.msra.mxu0 %v45
    %59 = vmatprep.subr.mxu0 0.0
    %60 = vmatpush1.msra.mxu0 0.0
    %61 = vmatprep.subr.mxu0 0.0
    %62 = vmatpush1.msra.mxu0 0.0
    %63 = vmatprep.subr.mxu0 0.0
    %64 = vmatpush1.msra.mxu0 0.0
    %65 = vmatprep.subr.mxu0 0.0
    %66 = vmatpush1.msra.mxu0 0.0
    %67 = vmatprep.subr.mxu0 0.0
    %68 = vmatpush1.msra.mxu0 0.0
    %69 = vmatprep.subr.mxu0 0.0
    %70 = vmatpush1.msra.mxu0 0.0
    %71 = vmatprep.subr.mxu0 0.0
    %72 = vmatpush1.msra.mxu0 0.0
    %73 = vmatprep.subr.mxu0 0.0
    %74 = vmatpush1.msra.mxu0 0.0
    %75 = vmatprep.subr.mxu0 0.0
    %76 = vmatpush1.msra.mxu0 0.0
    %77 = vmatprep.subr.mxu0 0.0
    %78 = vmatpush1.msra.mxu0 0.0
    %79 = vmatprep.subr.mxu0 0.0
    %80 = vmatpush1.msra.mxu0 0.0
    %81 = vmatprep.subr.mxu0 0.0
    %82 = vmatpush1.msra.mxu0 0.0
    %83 = vmatprep.subr.mxu0 0.0
    %84 = vmatpush1.msra.mxu0 0.0
    %85 = vmatprep.subr.mxu0 0.0
    %86 = vmatpush1.msra.mxu0 0.0
    %87 = vmatprep.subr.mxu0 0.0
    %88 = vmatpush1.msra.mxu0 0.0
    %89 = vmatprep.subr.mxu0 0.0
    %90 = vmatpush1.msra.mxu0 0.0
    %91 = vmatprep.subr.mxu0 0.0
    %92 = vmatpush1.msra.mxu0 0.0
    %93 = vmatprep.subr.mxu0 0.0
    %94 = vmatpush1.msra.mxu0 0.0
    %95 = vmatprep.subr.mxu0 0.0
    %96 = vmatpush1.msra.mxu0 0.0
    %97 = vmatprep.subr.mxu0 0.0
    %98 = vmatpush1.msra.mxu0 0.0
    %99 = vmatprep.subr.mxu0 0.0
    %100 = vmatpush1.msra.mxu0 0.0
    %101 = vmatprep.subr.mxu0 0.0
    %102 = vmatpush1.msra.mxu0 0.0
    %103 = vmatprep.subr.mxu0 0.0
    %104 = vmatpush1.msra.mxu0 0.0
    %105 = vmatprep.subr.mxu0 0.0
    %106 = vmatpush1.msra.mxu0 0.0
    %107 = vmatprep.subr.mxu0 0.0
    %108 = vmatpush1.msra.mxu0 0.0
    %109 = vmatprep.subr.mxu0 0.0
    %110 = vmatpush1.msra.mxu0 0.0
    %111 = vmatprep.subr.mxu0 0.0
    %112 = vmatpush1.msra.mxu0 0.0
    %113 = vmatprep.subr.mxu0 0.0
    %114 = vmatpush1.msra.mxu0 0.0
    %115 = vmatprep.subr.mxu0 0.0
    %116 = vmatpush1.msra.mxu0 0.0
    %117 = vmatprep.subr.mxu0 0.0
    %118 = vmatpush1.msra.mxu0 0.0
    %119 = vmatprep.mubr.f32.mxu0 0.0
    %120 = vmatmul.mubr.f32.gmra.mrb[0].mxu0 %v50
    %v121 = vpop.f32.mrb[0].mxu0
    %v122 = vadd.f32 0.0, %v121
    %v123 = vpop.f32.mrb[0].mxu0
    %124 = vmatprep.mubr.f32.mxu0 0.0
    %125 = vmatmul.mubr.f32.gmra.mrb[0].mxu0 %v53
    %v126 = vpop.f32.mrb[0].mxu0
    %v127 = vadd.f32 0.0, %v126
    %v128 = vpop.f32.mrb[0].mxu0
    %129 = vdwg.mxu0
    %v131 = vsel %vm48, %v42, 0
    %v134 = vsel %vm48, %v43, 0
    %136 = vmatprep.subr.mxu0 0.0
    %137 = vmatpush1.msra.mxu0 %v46
    %138 = vmatprep.subr.mxu0 0.0
    %139 = vmatpush1.msra.mxu0 %v47
    %140 = vmatprep.subr.mxu0 0.0
    %141 = vmatpush1.msra.mxu0 0.0
    %142 = vmatprep.subr.mxu0 0.0
    %143 = vmatpush1.msra.mxu0 0.0
    %144 = vmatprep.subr.mxu0 0.0
    %145 = vmatpush1.msra.mxu0 0.0
    %146 = vmatprep.subr.mxu0 0.0
    %147 = vmatpush1.msra.mxu0 0.0
    %148 = vmatprep.subr.mxu0 0.0
    %149 = vmatpush1.msra.mxu0 0.0
    %150 = vmatprep.subr.mxu0 0.0
    %151 = vmatpush1.msra.mxu0 0.0
    %152 = vmatprep.subr.mxu0 0.0
    %153 = vmatpush1.msra.mxu0 0.0
    %154 = vmatprep.subr.mxu0 0.0
    %155 = vmatpush1.msra.mxu0 0.0
    %156 = vmatprep.subr.mxu0 0.0
    %157 = vmatpush1.msra.mxu0 0.0
    %158 = vmatprep.subr.mxu0 0.0
    %159 = vmatpush1.msra.mxu0 0.0
    %160 = vmatprep.subr.mxu0 0.0
    %161 = vmatpush1.msra.mxu0 0.0
    %162 = vmatprep.subr.mxu0 0.0
    %163 = vmatpush1.msra.mxu0 0.0
    %164 = vmatprep.subr.mxu0 0.0
    %165 = vmatpush1.msra.mxu0 0.0
    %166 = vmatprep.subr.mxu0 0.0
    %167 = vmatpush1.msra.mxu0 0.0
    %168 = vmatprep.subr.mxu0 0.0
    %169 = vmatpush1.msra.mxu0 0.0
    %170 = vmatprep.subr.mxu0 0.0
    %171 = vmatpush1.msra.mxu0 0.0
    %172 = vmatprep.subr.mxu0 0.0
    %173 = vmatpush1.msra.mxu0 0.0
    %174 = vmatprep.subr.mxu0 0.0
    %175 = vmatpush1.msra.mxu0 0.0
    %176 = vmatprep.subr.mxu0 0.0
    %177 = vmatpush1.msra.mxu0 0.0
    %178 = vmatprep.subr.mxu0 0.0
    %179 = vmatpush1.msra.mxu0 0.0
    %180 = vmatprep.subr.mxu0 0.0
    %181 = vmatpush1.msra.mxu0 0.0
    %182 = vmatprep.subr.mxu0 0.0
    %183 = vmatpush1.msra.mxu0 0.0
    %184 = vmatprep.subr.mxu0 0.0
    %185 = vmatpush1.msra.mxu0 0.0
    %186 = vmatprep.subr.mxu0 0.0
    %187 = vmatpush1.msra.mxu0 0.0
    %188 = vmatprep.subr.mxu0 0.0
    %189 = vmatpush1.msra.mxu0 0.0
    %190 = vmatprep.subr.mxu0 0.0
    %191 = vmatpush1.msra.mxu0 0.0
    %192 = vmatprep.subr.mxu0 0.0
    %193 = vmatpush1.msra.mxu0 0.0
    %194 = vmatprep.subr.mxu0 0.0
    %195 = vmatpush1.msra.mxu0 0.0
    %196 = vmatprep.subr.mxu0 0.0
    %197 = vmatpush1.msra.mxu0 0.0
    %198 = vmatprep.subr.mxu0 0.0
    %199 = vmatpush1.msra.mxu0 0.0
    %200 = vmatprep.mubr.f32.mxu0 0.0
    %201 = vmatmul.mubr.f32.gmra.mrb[0].mxu0 %v131
    %v202 = vpop.f32.mrb[0].mxu0
    %v203 = vadd.f32 0.0, %v202
    %v204 = vpop.f32.mrb[0].mxu0
    %205 = vmatprep.mubr.f32.mxu0 0.0
    %206 = vmatmul.mubr.f32.gmra.mrb[0].mxu0 %v134
    %v207 = vpop.f32.mrb[0].mxu0
    %v208 = vadd.f32 0.0, %v207
    %v209 = vpop.f32.mrb[0].mxu0
    %210 = vdwg.mxu0
    %vm211 = vcmask 261120
    %212 = vst.msk [vmem:[#allocation7] sm:$0xff] %vm211, %v122
    %213 = vst.msk [vmem:[#allocation7 + $0x8] sm:$0xff] %vm211, %v127
    %214 = vst.msk [vmem:[#allocation7 + $0x10] sm:$0xff] %vm211, %v203
    %215 = vst.msk [vmem:[#allocation7 + $0x18] sm:$0xff] %vm211, %v208
    // Predicated region
    $region18: #{tpu_custom_call.1} parent=1 // pred_check
      _
    $region19: #{tpu_custom_call.1} parent=1 // pred_check_branch
      %217 = sbr.rel (0) target = $region21
    $region20: #{tpu_custom_call.1} parent=1 // pred_region
      %s219 = ssub.s32 512, 512
      %220 = vsyncadd [#allocation4], %s219
      %s221 = sshll.u32 [#allocation7], 4
      %s222 = int_to_ptr.vmem [resolvable:$true] %s221
      %227 = dma.vmem_to_hbm [thread:$0]  %s222, 512, %s2, [#allocation4], 128, 128, 8
    $region21: #{tpu_custom_call.1} parent=1 // pred_fallthru
      _
    // Predicated region
    $region22: #{tpu_custom_call.1} parent=1 // pred_check
      _
    $region23: #{tpu_custom_call.1} parent=1 // pred_check_branch
      %229 = sbr.rel (0) target = $region25
    $region24: #{tpu_custom_call.1} parent=1 // pred_region
      %230 = dma.done [#allocation4], 512
    $region25: #{tpu_custom_call.1} parent=1 // pred_fallthru
      _
    %231 = vsyncpa [#allocation3], 1
    %232 = vsyncpa [#allocation6], 1
    %233 = vsyncpa [#allocation4], 1

</llo_original>
